<compile_context>
chip_gen: v7x
topology: tpu7x:2x2x1
jax: 0.10.0
libtpu: 0.0.40
codegen_flags: <defaults>
</compile_context>

<pallas_src>
import jax
import jax.numpy as jnp
from jax.experimental import pallas as pl
from jax.experimental.pallas import tpu as pltpu

MIN_VAL = -0.5   # clamp_min bound
MAX_VAL = 0.5    # clamp_max bound

B = 1       # batch (matches the spec: x = torch.randn(1, 64))
F_IN = 64
F_OUT = 64


def linear_clamp_kernel(x_ref, wt_ref, b_ref, o_ref):
    # Linear: y = x @ W^T + b  (wt_ref already holds W^T, laid out (F_IN, F_OUT))
    y = jnp.dot(x_ref[...], wt_ref[...], preferred_element_type=jnp.float32)
    y = y + b_ref[...]
    # torch.clamp_max(v1, MAX_VAL) then torch.clamp_min(..., MIN_VAL)
    y = jnp.minimum(y, MAX_VAL)
    y = jnp.maximum(y, MIN_VAL)
    o_ref[...] = y.astype(o_ref.dtype)


def init_params(key):
    """One-time parameter construction; transpose/reshape done here, not per call."""
    kw, kb = jax.random.split(key)
    bound = 1.0 / jnp.sqrt(jnp.float32(F_IN))
    w = jax.random.uniform(kw, (F_OUT, F_IN), dtype=jnp.float32,
                           minval=-bound, maxval=bound)   # PyTorch layout
    b = jax.random.uniform(kb, (F_OUT,), dtype=jnp.float32,
                           minval=-bound, maxval=bound)
    wt = jnp.asarray(w.T)           # (F_IN, F_OUT), stored pre-transposed
    b2 = b.reshape(1, F_OUT)        # broadcastable row, stored once
    return w, b, wt, b2


@jax.jit
def model_forward(x, wt, b2):
    """x: (B, F_IN) f32, wt: (F_IN, F_OUT) f32 (pre-transposed), b2: (1, F_OUT)."""
    # Gridless call: whole operands live in VMEM; no pipeline machinery, no
    # double buffers — this op is pure fixed-overhead at this size.
    vmem_spec = pl.BlockSpec(memory_space=pltpu.MemorySpace.VMEM)
    return pl.pallas_call(
        linear_clamp_kernel,
        out_shape=jax.ShapeDtypeStruct((x.shape[0], F_OUT), jnp.float32),
        in_specs=[vmem_spec, vmem_spec, vmem_spec],
        out_specs=vmem_spec,
    )(x, wt, b2)


def reference_forward(x, w, b):
    v1 = x @ w.T + b
    return jnp.maximum(jnp.minimum(v1, MAX_VAL), MIN_VAL)


if __name__ == "__main__":
    key = jax.random.PRNGKey(0)
    kx, kp = jax.random.split(key)

    x = jax.random.normal(kx, (B, F_IN), dtype=jnp.float32)
    w, b, wt, b2 = init_params(kp)

    out = model_forward(x, wt, b2)
    out = jax.block_until_ready(out)

    ref = reference_forward(x, w, b)
    assert out.shape == (B, F_OUT)
    assert jnp.allclose(out, ref, atol=1e-5, rtol=1e-5)

    print("KERNEL_OK")
</pallas_src>

<mosaic_0001>
module attributes {stable_mosaic.version = 11 : i64} {
  func.func @linear_clamp_kernel(%arg0: memref<1x64xf32, #tpu.memory_space<vmem>>, %arg1: memref<64x64xf32, #tpu.memory_space<vmem>>, %arg2: memref<1x64xf32, #tpu.memory_space<vmem>>, %arg3: memref<1x64xf32, #tpu.memory_space<vmem>>) attributes {dimension_semantics = [], scalar_prefetch = 0 : i64, scratch_operands = 0 : i64, tpu.core_type = #tpu.core_type<tc>} {
    %c0 = arith.constant 0 : index
    %c0_0 = arith.constant 0 : index
    %0 = vector.load %arg0[%c0, %c0_0] : memref<1x64xf32, #tpu.memory_space<vmem>>, vector<1x64xf32>
    %c0_1 = arith.constant 0 : index
    %c0_2 = arith.constant 0 : index
    %1 = vector.load %arg1[%c0_1, %c0_2] : memref<64x64xf32, #tpu.memory_space<vmem>>, vector<64x64xf32>
    %cst = arith.constant dense<0.000000e+00> : vector<1x64xf32>
    %2 = tpu.matmul %0, %1, %cst {dimension_numbers = #tpu.dot_dimension_numbers<[1], [0], [0], [1], [0, 0, 1, 1], [], []>} : vector<1x64xf32>, vector<64x64xf32>, vector<1x64xf32> -> vector<1x64xf32>
    %c0_3 = arith.constant 0 : index
    %c0_4 = arith.constant 0 : index
    %3 = vector.load %arg2[%c0_3, %c0_4] : memref<1x64xf32, #tpu.memory_space<vmem>>, vector<1x64xf32>
    %4 = arith.addf %2, %3 : vector<1x64xf32>
    %cst_5 = arith.constant 5.000000e-01 : f32
    %5 = vector.broadcast %cst_5 : f32 to vector<1x64xf32>
    %6 = arith.minimumf %4, %5 : vector<1x64xf32>
    %cst_6 = arith.constant -5.000000e-01 : f32
    %7 = vector.broadcast %cst_6 : f32 to vector<1x64xf32>
    %8 = arith.maximumf %6, %7 : vector<1x64xf32>
    %c0_7 = arith.constant 0 : index
    %c0_8 = arith.constant 0 : index
    %9 = vector.load %arg3[%c0_7, %c0_8] : memref<1x64xf32, #tpu.memory_space<vmem>>, vector<1x64xf32>
    tpu.vector_store %arg3[%c0_7, %c0_8], %8 {strides = array<i32>} : memref<1x64xf32, #tpu.memory_space<vmem>>, vector<1x64xf32>,
    return
  }
}

</mosaic_0001>

<llo_original>
// kernel: model_forward.1
$region0: #{model_forward.1}
  #allocation0 [shape = 'u32[]', space=smem, size = 0x4, offset = 0x4, fixed_abs, tag = 'smem constant byte address 0x4 - core index']
  #allocation1 [shape = 'u32[144,128]{1,0:T(1,128)}', space=vmem, size = 0x12000, scoped, tag = 'internal scratch']
  %s0 = inlined_call_operand.hbm [shape: f32[1,64], index: 0, kind: input, shape index: {}]
  %s1 = inlined_call_operand.hbm [shape: f32[64,64], index: 1, kind: input, shape index: {}]
  %s2 = inlined_call_operand.vmem [shape: f32[1,64], index: 2, kind: input, shape index: {}]
  %s3 = inlined_call_operand.hbm [shape: f32[1,64], index: 3, kind: output, shape index: {}]
  %s4 = sld [smem:[#allocation0]]
  $region30: #{model_forward.1} parent=0
    _
  %s6 = ssub.s32 1, %s4
  %s7 = scalar_select 0, %s6, %s4
  $region1: #{model_forward.1} parent=0
    #allocation2 [shape = 'u8[512]{0}', space=vmem, size = 0x400, scoped, tag = 'input window, operand 0, single buffered']
    #allocation3 [shape = 's32[1]{0}', space=sflag, size = 0x4, scoped, tag = 'scoped memory for model_forward.1']
    #allocation4 [shape = 's32[1]{0}', space=sflag, size = 0x4, scoped, tag = 'scoped memory for model_forward.1']
    #allocation5 [shape = 'u8[32768]{0}', space=vmem, size = 0x8000, scoped, tag = 'input window, operand 1, single buffered']
    #allocation6 [shape = 's32[1]{0}', space=sflag, size = 0x4, scoped, tag = 'scoped memory for model_forward.1']
    #allocation7 [shape = 'u8[512]{0}', space=vmem, size = 0x400, scoped, tag = 'output window, operand 0, single buffered']
    %8 = vsyncpa [#allocation3], 0
    %9 = vsyncpa [#allocation6], 0
    %10 = vsyncpa [#allocation4], 0
    // Predicated region
    $region2: #{model_forward.1} parent=1 // pred_check
      _
    $region3: #{model_forward.1} parent=1 // pred_check_branch
      %12 = sbr.rel (0) target = $region5
    $region4: #{model_forward.1} parent=1 // pred_region
      %s14 = ssub.s32 16, 16
      %15 = vsyncadd [#allocation3], %s14
      %s17 = sshll.u32 [#allocation2], 4
      %s18 = int_to_ptr.vmem [resolvable:$true] %s17
      %20 = dma.hbm_to_vmem [thread:$0]  %s0, 16, %s18, [#allocation3]
    $region5: #{model_forward.1} parent=1 // pred_fallthru
      _
    // Predicated region
    $region6: #{model_forward.1} parent=1 // pred_check
      _
    $region7: #{model_forward.1} parent=1 // pred_check_branch
      %22 = sbr.rel (0) target = $region9
    $region8: #{model_forward.1} parent=1 // pred_region
      %s24 = ssub.s32 1024, 1024
      %25 = vsyncadd [#allocation6], %s24
      %s26 = sshll.u32 [#allocation5], 4
      %s27 = int_to_ptr.vmem [resolvable:$true] %s26
      %32 = dma.hbm_to_vmem [thread:$0]  %s1, 1024, %s27, [#allocation6], 128, 128, 8
    $region9: #{model_forward.1} parent=1 // pred_fallthru
      _
    // Predicated region
    $region10: #{model_forward.1} parent=1 // pred_check
      _
    $region11: #{model_forward.1} parent=1 // pred_check_branch
      %34 = sbr.rel (0) target = $region13
    $region12: #{model_forward.1} parent=1 // pred_region
      _
    $region13: #{model_forward.1} parent=1 // pred_fallthru
      _
    // Predicated region
    $region14: #{model_forward.1} parent=1 // pred_check
      _
    $region15: #{model_forward.1} parent=1 // pred_check_branch
      %36 = sbr.rel (0) target = $region17
    $region16: #{model_forward.1} parent=1 // pred_region
      %37 = dma.done [#allocation3], 16
    $region17: #{model_forward.1} parent=1 // pred_fallthru
      _
    // Predicated region
    $region18: #{model_forward.1} parent=1 // pred_check
      _
    $region19: #{model_forward.1} parent=1 // pred_check_branch
      %39 = sbr.rel (0) target = $region21
    $region20: #{model_forward.1} parent=1 // pred_region
      %40 = dma.done [#allocation6], 1024
    $region21: #{model_forward.1} parent=1 // pred_fallthru
      _
    %v41 = vld [vmem:[#allocation2] sm:$0x1]
    %v42 = vld [vmem:[#allocation5] sm:$0xff]
    %v43 = vld [vmem:[#allocation5 + $0x8] sm:$0xff]
    %v44 = vld [vmem:[#allocation5 + $0x10] sm:$0xff]
    %v45 = vld [vmem:[#allocation5 + $0x18] sm:$0xff]
    %v46 = vld [vmem:[#allocation5 + $0x20] sm:$0xff]
    %v47 = vld [vmem:[#allocation5 + $0x28] sm:$0xff]
    %v48 = vld [vmem:[#allocation5 + $0x30] sm:$0xff]
    %v49 = vld [vmem:[#allocation5 + $0x38] sm:$0xff]
    %v50 = vld [vmem:[%s2] sm:$0x1]
    %vm51 = vcmask 523264
    %v53 = vsel %vm51, %v41, 0
    %55 = vmatprep.subr.mxu0 0.0
    %56 = vmatpush1.msra.mxu0 %v42
    %57 = vmatprep.subr.mxu0 0.0
    %58 = vmatpush1.msra.mxu0 %v43
    %59 = vmatprep.subr.mxu0 0.0
    %60 = vmatpush1.msra.mxu0 %v44
    %61 = vmatprep.subr.mxu0 0.0
    %62 = vmatpush1.msra.mxu0 %v45
    %63 = vmatprep.subr.mxu0 0.0
    %64 = vmatpush1.msra.mxu0 %v46
    %65 = vmatprep.subr.mxu0 0.0
    %66 = vmatpush1.msra.mxu0 %v47
    %67 = vmatprep.subr.mxu0 0.0
    %68 = vmatpush1.msra.mxu0 %v48
    %69 = vmatprep.subr.mxu0 0.0
    %70 = vmatpush1.msra.mxu0 %v49
    %71 = vmatprep.subr.mxu0 0.0
    %72 = vmatpush1.msra.mxu0 0.0
    %73 = vmatprep.subr.mxu0 0.0
    %74 = vmatpush1.msra.mxu0 0.0
    %75 = vmatprep.subr.mxu0 0.0
    %76 = vmatpush1.msra.mxu0 0.0
    %77 = vmatprep.subr.mxu0 0.0
    %78 = vmatpush1.msra.mxu0 0.0
    %79 = vmatprep.subr.mxu0 0.0
    %80 = vmatpush1.msra.mxu0 0.0
    %81 = vmatprep.subr.mxu0 0.0
    %82 = vmatpush1.msra.mxu0 0.0
    %83 = vmatprep.subr.mxu0 0.0
    %84 = vmatpush1.msra.mxu0 0.0
    %85 = vmatprep.subr.mxu0 0.0
    %86 = vmatpush1.msra.mxu0 0.0
    %87 = vmatprep.subr.mxu0 0.0
    %88 = vmatpush1.msra.mxu0 0.0
    %89 = vmatprep.subr.mxu0 0.0
    %90 = vmatpush1.msra.mxu0 0.0
    %91 = vmatprep.subr.mxu0 0.0
    %92 = vmatpush1.msra.mxu0 0.0
    %93 = vmatprep.subr.mxu0 0.0
    %94 = vmatpush1.msra.mxu0 0.0
    %95 = vmatprep.subr.mxu0 0.0
    %96 = vmatpush1.msra.mxu0 0.0
    %97 = vmatprep.subr.mxu0 0.0
    %98 = vmatpush1.msra.mxu0 0.0
    %99 = vmatprep.subr.mxu0 0.0
    %100 = vmatpush1.msra.mxu0 0.0
    %101 = vmatprep.subr.mxu0 0.0
    %102 = vmatpush1.msra.mxu0 0.0
    %103 = vmatprep.subr.mxu0 0.0
    %104 = vmatpush1.msra.mxu0 0.0
    %105 = vmatprep.subr.mxu0 0.0
    %106 = vmatpush1.msra.mxu0 0.0
    %107 = vmatprep.subr.mxu0 0.0
    %108 = vmatpush1.msra.mxu0 0.0
    %109 = vmatprep.subr.mxu0 0.0
    %110 = vmatpush1.msra.mxu0 0.0
    %111 = vmatprep.subr.mxu0 0.0
    %112 = vmatpush1.msra.mxu0 0.0
    %113 = vmatprep.subr.mxu0 0.0
    %114 = vmatpush1.msra.mxu0 0.0
    %115 = vmatprep.subr.mxu0 0.0
    %116 = vmatpush1.msra.mxu0 0.0
    %117 = vmatprep.subr.mxu0 0.0
    %118 = vmatpush1.msra.mxu0 0.0
    %119 = vmatprep.mubr.f32.mxu0 0.0
    %120 = vmatmul.mubr.f32.gmra.mrb[0].mxu0 %v53
    %v121 = vpop.f32.mrb[0].mxu0
    %v122 = vadd.f32 %v50, %v121
    %v123 = vpop.f32.mrb[0].mxu0
    %124 = vdwg.mxu0
    %v125 = vmin.f32 %v122, 0.5
    %v126 = vmax.f32 %v125, -0.5
    %vm127 = vcmask 516096
    %128 = vst.msk [vmem:[#allocation7] sm:$0x1] %vm127, %v126
    // Predicated region
    $region22: #{model_forward.1} parent=1 // pred_check
      _
    $region23: #{model_forward.1} parent=1 // pred_check_branch
      %130 = sbr.rel (0) target = $region25
    $region24: #{model_forward.1} parent=1 // pred_region
      %s132 = ssub.s32 16, 16
      %133 = vsyncadd [#allocation4], %s132
      %s135 = sshll.u32 [#allocation7], 4
      %s136 = int_to_ptr.vmem [resolvable:$true] %s135
      %138 = dma.vmem_to_hbm [thread:$0]  %s136, 16, %s3, [#allocation4]
    $region25: #{model_forward.1} parent=1 // pred_fallthru
      _
    // Predicated region
    $region26: #{model_forward.1} parent=1 // pred_check
      _
    $region27: #{model_forward.1} parent=1 // pred_check_branch
      %140 = sbr.rel (0) target = $region29
    $region28: #{model_forward.1} parent=1 // pred_region
      %141 = dma.done [#allocation4], 16
    $region29: #{model_forward.1} parent=1 // pred_fallthru
      _
    %142 = vsyncpa [#allocation3], 1
    %143 = vsyncpa [#allocation6], 1
    %144 = vsyncpa [#allocation4], 1

</llo_original>
